<compile_context>
chip_gen: v5e
topology: v5e:2x2
jax: 0.10.0
libtpu: 0.0.40
codegen_flags: <defaults>
</compile_context>

<pallas_src>
import jax
import jax.numpy as jnp
from jax.experimental import pallas as pl
from jax.experimental.pallas import tpu as pltpu

# ----------------------------- configuration --------------------------------
EMBED_DIM = 128              # small, lane-aligned stand-in for the default 384
HIDDEN1 = EMBED_DIM // 2     # 64
HIDDEN2 = EMBED_DIM // 4     # 32
NUM_OUT = 2
BATCH = 2
NUM_TOKENS = 16
LN_EPS = 1e-5                # nn.LayerNorm default


def _gelu(x):
    # exact (erf) GELU, matching nn.GELU() default
    return 0.5 * x * (1.0 + jax.lax.erf(x * jnp.float32(0.7071067811865476)))


# ------------------------------ Pallas kernel --------------------------------
def _predictor_kernel(
    x_ref,       # (BN, C)  f32   flattened tokens
    s_ref,       # (B, BN)  bf16  per-batch token-mean factor (1/N entries)
    g_ref,       # (BN, B)  bf16  broadcast-back factor (block of ones)
    vec_ref,     # (8, C)   f32   packed small vectors (ln_g, ln_b, b_in, b1, b2, bd)
    win_ref,     # (C, C)   bf16  in_conv Linear weight
    w1l_ref,     # (C, H1)  bf16  out_conv fc1, rows >= C/2 zeroed  (local path)
    w1g_ref,     # (C, H1)  bf16  out_conv fc1, rows <  C/2 zeroed  (global path)
    w2_ref,      # (H1, H2) bf16  out_conv fc2
    wd_ref,      # (H2, 1)  bf16  fc3 logit-difference weight (w3[:,0]-w3[:,1])
    o_ref,       # (BN, 2)  f32   keep/drop probabilities
):
    f32, bf16 = jnp.float32, jnp.bfloat16

    x = x_ref[...]                                            # (BN, C) f32

    # packed small vectors
    ln_g = vec_ref[0:1, :]                                    # (1, C)
    ln_b = vec_ref[1:2, :]
    b_in = vec_ref[2:3, :]
    b1 = vec_ref[3:4, :HIDDEN1]                               # (1, H1)
    b2 = vec_ref[4:5, :HIDDEN2]                               # (1, H2)
    bd = vec_ref[5:6, 0:1]                                    # (1, 1)  b3[0]-b3[1]

    # --- in_conv: LayerNorm (f32) -> Linear (bf16 MXU, f32 acc) -> GELU ---
    mu = jnp.mean(x, axis=-1, keepdims=True)
    var = jnp.mean(jnp.square(x - mu), axis=-1, keepdims=True)
    xn = (x - mu) * jax.lax.rsqrt(var + LN_EPS) * ln_g + ln_b
    h = jnp.dot(xn.astype(bf16), win_ref[...],
                preferred_element_type=f32) + b_in
    h = _gelu(h)                                              # (BN, C) f32
    h16 = h.astype(bf16)

    # --- local path: h @ W1[:C/2]  (row-masked copy of W1) ---
    loc = jnp.dot(h16, w1l_ref[...], preferred_element_type=f32)     # (BN, H1)

    # --- global path: pool FIRST, then tiny matmul, then broadcast back ---
    pooled = jnp.dot(s_ref[...], h16, preferred_element_type=f32)    # (B, C)
    glo_b = jnp.dot(pooled.astype(bf16), w1g_ref[...],
                    preferred_element_type=f32)                       # (B, H1)
    glo = jnp.dot(g_ref[...], glo_b.astype(bf16),
                  preferred_element_type=f32)                         # (BN, H1)

    t = _gelu(loc + glo + b1)                                         # (BN, H1)

    # --- remaining out_conv layers ---
    t = _gelu(jnp.dot(t.astype(bf16), w2_ref[...],
                      preferred_element_type=f32) + b2)               # (BN, H2)

    # --- 2-class softmax, exactly, as a sigmoid of the logit difference ---
    d = jnp.dot(t.astype(bf16), wd_ref[...],
                preferred_element_type=f32) + bd                      # (BN, 1)
    p0 = 0.5 * (jnp.tanh(0.5 * d) + 1.0)        # sigmoid(d) == softmax col 0
    o_ref[:, 0:1] = p0
    o_ref[:, 1:2] = 1.0 - p0


# --------------------- one-time parameter preparation ------------------------
def prepare_params(params, batch, num_tokens):
    """Hoisted out of the per-call path: masking, bf16 casts, bias packing,
    rank-B pooling factors."""
    C, half = EMBED_DIM, EMBED_DIM // 2
    bf16 = jnp.bfloat16

    # Row-masked copies of W1 (folds the [local, global] concat into matmuls).
    row_is_local = (jnp.arange(C) < half)[:, None]
    w1 = params["w1"]
    w1_local = jnp.where(row_is_local, w1, 0.0).astype(bf16)
    w1_global = jnp.where(row_is_local, 0.0, w1).astype(bf16)

    # fc3 logit-difference weight/bias (exact 2-class softmax via sigmoid).
    wd = (params["w3"][:, 0:1] - params["w3"][:, 1:2]).astype(bf16)   # (H2, 1)
    bd = params["b3"][0, 0] - params["b3"][0, 1]

    # Pack the small vectors into a single (8, C) f32 slab (one DMA).
    vecs = jnp.zeros((8, C), jnp.float32)
    vecs = vecs.at[0, :].set(params["ln_g"][0])
    vecs = vecs.at[1, :].set(params["ln_b"][0])
    vecs = vecs.at[2, :].set(params["b_in"][0])
    vecs = vecs.at[3, :HIDDEN1].set(params["b1"][0])
    vecs = vecs.at[4, :HIDDEN2].set(params["b2"][0])
    vecs = vecs.at[5, 0].set(bd)

    # Rank-B pooling factors (replace the dense (BN, BN) kron matrix):
    #   S (B, BN): per-batch mean over tokens; G (BN, B): broadcast back.
    B, N = batch, num_tokens
    eye = jnp.eye(B, dtype=jnp.float32)
    S = jnp.kron(eye, jnp.full((1, N), 1.0 / N, jnp.float32)).astype(bf16)
    G = jnp.kron(eye, jnp.ones((N, 1), jnp.float32)).astype(bf16)

    return {
        "S": S, "G": G, "vecs": vecs,
        "w_in": params["w_in"].astype(bf16),
        "w1_local": w1_local, "w1_global": w1_global,
        "w2": params["w2"].astype(bf16),
        "wd": wd,
    }


# ------------------------------ kernel wrapper --------------------------------
@jax.jit
def predictor_forward(x, prep):
    """x: (B, N, C) tokens -> (B, N, 2) keep/drop probabilities."""
    x = x.astype(jnp.float32)
    B, N, C = x.shape

    vmem_spec = lambda: pl.BlockSpec(memory_space=pltpu.MemorySpace.VMEM)
    out = pl.pallas_call(
        _predictor_kernel,
        out_shape=jax.ShapeDtypeStruct((B * N, NUM_OUT), jnp.float32),
        in_specs=[vmem_spec() for _ in range(9)],
        out_specs=vmem_spec(),
    )(
        x.reshape(B * N, C),
        prep["S"], prep["G"], prep["vecs"],
        prep["w_in"], prep["w1_local"], prep["w1_global"],
        prep["w2"], prep["wd"],
    )
    return out.reshape(B, N, NUM_OUT)


# ------------------------------- parameters ----------------------------------
def init_params(key):
    ks = jax.random.split(key, 8)
    nrm = lambda k, shape: (0.02 * jax.random.normal(k, shape)).astype(jnp.float32)
    return {
        "ln_g": jnp.ones((1, EMBED_DIM), jnp.float32),
        "ln_b": jnp.zeros((1, EMBED_DIM), jnp.float32),
        # Linear weights stored as (in_features, out_features): kernel does x @ W
        "w_in": nrm(ks[0], (EMBED_DIM, EMBED_DIM)),
        "b_in": nrm(ks[1], (1, EMBED_DIM)),
        "w1": nrm(ks[2], (EMBED_DIM, HIDDEN1)),
        "b1": nrm(ks[3], (1, HIDDEN1)),
        "w2": nrm(ks[4], (HIDDEN1, HIDDEN2)),
        "b2": nrm(ks[5], (1, HIDDEN2)),
        "w3": nrm(ks[6], (HIDDEN2, NUM_OUT)),
        "b3": nrm(ks[7], (1, NUM_OUT)),
    }


# ------------------------- pure-JAX reference (for checking) ------------------
def predictor_reference(x, params):
    x = x.astype(jnp.float32)
    C = x.shape[-1]
    half = C // 2
    mu = jnp.mean(x, -1, keepdims=True)
    var = jnp.mean((x - mu) ** 2, -1, keepdims=True)
    xn = (x - mu) / jnp.sqrt(var + LN_EPS) * params["ln_g"][0] + params["ln_b"][0]
    h = _gelu(xn @ params["w_in"] + params["b_in"][0])
    local_x = h[:, :, :half]
    global_x = jnp.mean(h[:, :, half:], axis=1, keepdims=True)
    hcat = jnp.concatenate(
        [local_x, jnp.broadcast_to(global_x, local_x.shape)], axis=-1)
    t = _gelu(hcat @ params["w1"] + params["b1"][0])
    t = _gelu(t @ params["w2"] + params["b2"][0])
    logits = t @ params["w3"] + params["b3"][0]
    return jax.nn.softmax(logits, axis=-1)


# ----------------------------------- main -------------------------------------
if __name__ == "__main__":
    key = jax.random.PRNGKey(0)
    k_param, k_x = jax.random.split(key)
    params = init_params(k_param)
    prep = prepare_params(params, BATCH, NUM_TOKENS)
    x = jax.random.normal(k_x, (BATCH, NUM_TOKENS, EMBED_DIM), dtype=jnp.float32)

    out = predictor_forward(x, prep)
    jax.block_until_ready(out)
    assert out.shape == (BATCH, NUM_TOKENS, NUM_OUT)

    ref = predictor_reference(x, params)
    err = float(jnp.max(jnp.abs(out - ref)))
    assert err < 5e-3, f"kernel/reference mismatch: {err}"

    print("KERNEL_OK")
</pallas_src>

<mosaic_0001>
module attributes {stable_mosaic.version = 11 : i64} {
  func.func @_predictor_kernel(%arg0: memref<32x128xf32, #tpu.memory_space<vmem>>, %arg1: memref<2x32xbf16, #tpu.memory_space<vmem>>, %arg2: memref<32x2xbf16, #tpu.memory_space<vmem>>, %arg3: memref<8x128xf32, #tpu.memory_space<vmem>>, %arg4: memref<128x128xbf16, #tpu.memory_space<vmem>>, %arg5: memref<128x64xbf16, #tpu.memory_space<vmem>>, %arg6: memref<128x64xbf16, #tpu.memory_space<vmem>>, %arg7: memref<64x32xbf16, #tpu.memory_space<vmem>>, %arg8: memref<32x1xbf16, #tpu.memory_space<vmem>>, %arg9: memref<32x2xf32, #tpu.memory_space<vmem>>) attributes {dimension_semantics = [], scalar_prefetch = 0 : i64, scratch_operands = 0 : i64, tpu.core_type = #tpu.core_type<tc>} {
    %c0 = arith.constant 0 : index
    %c0_0 = arith.constant 0 : index
    %0 = vector.load %arg0[%c0, %c0_0] : memref<32x128xf32, #tpu.memory_space<vmem>>, vector<32x128xf32>
    %c0_1 = arith.constant 0 : index
    %c0_2 = arith.constant 0 : index
    %1 = vector.load %arg3[%c0_1, %c0_2] : memref<8x128xf32, #tpu.memory_space<vmem>>, vector<1x128xf32>
    %c1 = arith.constant 1 : index
    %c0_3 = arith.constant 0 : index
    %2 = vector.load %arg3[%c1, %c0_3] : memref<8x128xf32, #tpu.memory_space<vmem>>, vector<1x128xf32>
    %c2 = arith.constant 2 : index
    %c0_4 = arith.constant 0 : index
    %3 = vector.load %arg3[%c2, %c0_4] : memref<8x128xf32, #tpu.memory_space<vmem>>, vector<1x128xf32>
    %c3 = arith.constant 3 : index
    %c0_5 = arith.constant 0 : index
    %4 = vector.load %arg3[%c3, %c0_5] : memref<8x128xf32, #tpu.memory_space<vmem>>, vector<1x64xf32>
    %c4 = arith.constant 4 : index
    %c0_6 = arith.constant 0 : index
    %5 = vector.load %arg3[%c4, %c0_6] : memref<8x128xf32, #tpu.memory_space<vmem>>, vector<1x32xf32>
    %c5 = arith.constant 5 : index
    %c0_7 = arith.constant 0 : index
    %6 = vector.load %arg3[%c5, %c0_7] : memref<8x128xf32, #tpu.memory_space<vmem>>, vector<1x1xf32>
    %cst = arith.constant dense<0.000000e+00> : vector<32xf32>
    %7 = vector.multi_reduction <add>, %0, %cst [1] : vector<32x128xf32> to vector<32xf32>
    %8 = vector.shape_cast %7 : vector<32xf32> to vector<32x1xf32>
    %cst_8 = arith.constant 1.280000e+02 : f32
    %9 = vector.broadcast %cst_8 : f32 to vector<32x1xf32>
    %10 = arith.divf %8, %9 : vector<32x1xf32>
    %11 = vector.broadcast %10 : vector<32x1xf32> to vector<32x128xf32>
    %12 = arith.subf %0, %11 : vector<32x128xf32>
    %13 = arith.mulf %12, %12 : vector<32x128xf32>
    %cst_9 = arith.constant dense<0.000000e+00> : vector<32xf32>
    %14 = vector.multi_reduction <add>, %13, %cst_9 [1] : vector<32x128xf32> to vector<32xf32>
    %15 = vector.shape_cast %14 : vector<32xf32> to vector<32x1xf32>
    %cst_10 = arith.constant 1.280000e+02 : f32
    %16 = vector.broadcast %cst_10 : f32 to vector<32x1xf32>
    %17 = arith.divf %15, %16 : vector<32x1xf32>
    %18 = vector.broadcast %10 : vector<32x1xf32> to vector<32x128xf32>
    %19 = arith.subf %0, %18 : vector<32x128xf32>
    %cst_11 = arith.constant 9.99999974E-6 : f32
    %20 = vector.broadcast %cst_11 : f32 to vector<32x1xf32>
    %21 = arith.addf %17, %20 : vector<32x1xf32>
    %22 = math.rsqrt %21 : vector<32x1xf32>
    %23 = vector.broadcast %22 : vector<32x1xf32> to vector<32x128xf32>
    %24 = arith.mulf %19, %23 : vector<32x128xf32>
    %25 = vector.broadcast %1 : vector<1x128xf32> to vector<32x128xf32>
    %26 = arith.mulf %24, %25 : vector<32x128xf32>
    %27 = vector.broadcast %2 : vector<1x128xf32> to vector<32x128xf32>
    %28 = arith.addf %26, %27 : vector<32x128xf32>
    %29 = arith.truncf %28 : vector<32x128xf32> to vector<32x128xbf16>
    %c0_12 = arith.constant 0 : index
    %c0_13 = arith.constant 0 : index
    %30 = vector.load %arg4[%c0_12, %c0_13] : memref<128x128xbf16, #tpu.memory_space<vmem>>, vector<128x128xbf16>
    %cst_14 = arith.constant dense<0.000000e+00> : vector<32x128xf32>
    %31 = tpu.matmul %29, %30, %cst_14 {dimension_numbers = #tpu.dot_dimension_numbers<[1], [0], [0], [1], [0, 0, 1, 1], [], []>} : vector<32x128xbf16>, vector<128x128xbf16>, vector<32x128xf32> -> vector<32x128xf32>
    %32 = vector.broadcast %3 : vector<1x128xf32> to vector<32x128xf32>
    %33 = arith.addf %31, %32 : vector<32x128xf32>
    %cst_15 = arith.constant 5.000000e-01 : f32
    %34 = vector.broadcast %cst_15 : f32 to vector<32x128xf32>
    %35 = arith.mulf %34, %33 : vector<32x128xf32>
    %cst_16 = arith.constant 0.707106769 : f32
    %36 = vector.broadcast %cst_16 : f32 to vector<32x128xf32>
    %37 = arith.mulf %33, %36 : vector<32x128xf32>
    %38 = math.erf %37 : vector<32x128xf32>
    %cst_17 = arith.constant 1.000000e+00 : f32
    %39 = vector.broadcast %cst_17 : f32 to vector<32x128xf32>
    %40 = arith.addf %39, %38 : vector<32x128xf32>
    %41 = arith.mulf %35, %40 : vector<32x128xf32>
    %42 = arith.truncf %41 : vector<32x128xf32> to vector<32x128xbf16>
    %c0_18 = arith.constant 0 : index
    %c0_19 = arith.constant 0 : index
    %43 = vector.load %arg5[%c0_18, %c0_19] : memref<128x64xbf16, #tpu.memory_space<vmem>>, vector<128x64xbf16>
    %cst_20 = arith.constant dense<0.000000e+00> : vector<32x64xf32>
    %44 = tpu.matmul %42, %43, %cst_20 {dimension_numbers = #tpu.dot_dimension_numbers<[1], [0], [0], [1], [0, 0, 1, 1], [], []>} : vector<32x128xbf16>, vector<128x64xbf16>, vector<32x64xf32> -> vector<32x64xf32>
    %c0_21 = arith.constant 0 : index
    %c0_22 = arith.constant 0 : index
    %45 = vector.load %arg1[%c0_21, %c0_22] : memref<2x32xbf16, #tpu.memory_space<vmem>>, vector<2x32xbf16>
    %cst_23 = arith.constant dense<0.000000e+00> : vector<2x128xf32>
    %46 = tpu.matmul %45, %42, %cst_23 {dimension_numbers = #tpu.dot_dimension_numbers<[1], [0], [0], [1], [0, 0, 1, 1], [], []>} : vector<2x32xbf16>, vector<32x128xbf16>, vector<2x128xf32> -> vector<2x128xf32>
    %47 = arith.truncf %46 : vector<2x128xf32> to vector<2x128xbf16>
    %c0_24 = arith.constant 0 : index
    %c0_25 = arith.constant 0 : index
    %48 = vector.load %arg6[%c0_24, %c0_25] : memref<128x64xbf16, #tpu.memory_space<vmem>>, vector<128x64xbf16>
    %cst_26 = arith.constant dense<0.000000e+00> : vector<2x64xf32>
    %49 = tpu.matmul %47, %48, %cst_26 {dimension_numbers = #tpu.dot_dimension_numbers<[1], [0], [0], [1], [0, 0, 1, 1], [], []>} : vector<2x128xbf16>, vector<128x64xbf16>, vector<2x64xf32> -> vector<2x64xf32>
    %c0_27 = arith.constant 0 : index
    %c0_28 = arith.constant 0 : index
    %50 = vector.load %arg2[%c0_27, %c0_28] : memref<32x2xbf16, #tpu.memory_space<vmem>>, vector<32x2xbf16>
    %51 = arith.truncf %49 : vector<2x64xf32> to vector<2x64xbf16>
    %cst_29 = arith.constant dense<0.000000e+00> : vector<32x64xf32>
    %52 = tpu.matmul %50, %51, %cst_29 {dimension_numbers = #tpu.dot_dimension_numbers<[1], [0], [0], [1], [0, 0, 1, 1], [], []>} : vector<32x2xbf16>, vector<2x64xbf16>, vector<32x64xf32> -> vector<32x64xf32>
    %53 = arith.addf %44, %52 : vector<32x64xf32>
    %54 = vector.broadcast %4 : vector<1x64xf32> to vector<32x64xf32>
    %55 = arith.addf %53, %54 : vector<32x64xf32>
    %cst_30 = arith.constant 5.000000e-01 : f32
    %56 = vector.broadcast %cst_30 : f32 to vector<32x64xf32>
    %57 = arith.mulf %56, %55 : vector<32x64xf32>
    %cst_31 = arith.constant 0.707106769 : f32
    %58 = vector.broadcast %cst_31 : f32 to vector<32x64xf32>
    %59 = arith.mulf %55, %58 : vector<32x64xf32>
    %60 = math.erf %59 : vector<32x64xf32>
    %cst_32 = arith.constant 1.000000e+00 : f32
    %61 = vector.broadcast %cst_32 : f32 to vector<32x64xf32>
    %62 = arith.addf %61, %60 : vector<32x64xf32>
    %63 = arith.mulf %57, %62 : vector<32x64xf32>
    %64 = arith.truncf %63 : vector<32x64xf32> to vector<32x64xbf16>
    %c0_33 = arith.constant 0 : index
    %c0_34 = arith.constant 0 : index
    %65 = vector.load %arg7[%c0_33, %c0_34] : memref<64x32xbf16, #tpu.memory_space<vmem>>, vector<64x32xbf16>
    %cst_35 = arith.constant dense<0.000000e+00> : vector<32x32xf32>
    %66 = tpu.matmul %64, %65, %cst_35 {dimension_numbers = #tpu.dot_dimension_numbers<[1], [0], [0], [1], [0, 0, 1, 1], [], []>} : vector<32x64xbf16>, vector<64x32xbf16>, vector<32x32xf32> -> vector<32x32xf32>
    %67 = vector.broadcast %5 : vector<1x32xf32> to vector<32x32xf32>
    %68 = arith.addf %66, %67 : vector<32x32xf32>
    %cst_36 = arith.constant 5.000000e-01 : f32
    %69 = vector.broadcast %cst_36 : f32 to vector<32x32xf32>
    %70 = arith.mulf %69, %68 : vector<32x32xf32>
    %cst_37 = arith.constant 0.707106769 : f32
    %71 = vector.broadcast %cst_37 : f32 to vector<32x32xf32>
    %72 = arith.mulf %68, %71 : vector<32x32xf32>
    %73 = math.erf %72 : vector<32x32xf32>
    %cst_38 = arith.constant 1.000000e+00 : f32
    %74 = vector.broadcast %cst_38 : f32 to vector<32x32xf32>
    %75 = arith.addf %74, %73 : vector<32x32xf32>
    %76 = arith.mulf %70, %75 : vector<32x32xf32>
    %77 = arith.truncf %76 : vector<32x32xf32> to vector<32x32xbf16>
    %c0_39 = arith.constant 0 : index
    %c0_40 = arith.constant 0 : index
    %78 = vector.load %arg8[%c0_39, %c0_40] : memref<32x1xbf16, #tpu.memory_space<vmem>>, vector<32x1xbf16>
    %cst_41 = arith.constant dense<0.000000e+00> : vector<32x1xf32>
    %79 = tpu.matmul %77, %78, %cst_41 {dimension_numbers = #tpu.dot_dimension_numbers<[1], [0], [0], [1], [0, 0, 1, 1], [], []>} : vector<32x32xbf16>, vector<32x1xbf16>, vector<32x1xf32> -> vector<32x1xf32>
    %80 = vector.broadcast %6 : vector<1x1xf32> to vector<32x1xf32>
    %81 = arith.addf %79, %80 : vector<32x1xf32>
    %cst_42 = arith.constant 5.000000e-01 : f32
    %82 = vector.broadcast %cst_42 : f32 to vector<32x1xf32>
    %83 = arith.mulf %82, %81 : vector<32x1xf32>
    %84 = math.tanh %83 : vector<32x1xf32>
    %cst_43 = arith.constant 1.000000e+00 : f32
    %85 = vector.broadcast %cst_43 : f32 to vector<32x1xf32>
    %86 = arith.addf %84, %85 : vector<32x1xf32>
    %cst_44 = arith.constant 5.000000e-01 : f32
    %87 = vector.broadcast %cst_44 : f32 to vector<32x1xf32>
    %88 = arith.mulf %87, %86 : vector<32x1xf32>
    %c0_45 = arith.constant 0 : index
    %c0_46 = arith.constant 0 : index
    %89 = vector.load %arg9[%c0_45, %c0_46] : memref<32x2xf32, #tpu.memory_space<vmem>>, vector<32x1xf32>
    tpu.vector_store %arg9[%c0_45, %c0_46], %88 {strides = array<i32>} : memref<32x2xf32, #tpu.memory_space<vmem>>, vector<32x1xf32>,
    %cst_47 = arith.constant 1.000000e+00 : f32
    %90 = vector.broadcast %cst_47 : f32 to vector<32x1xf32>
    %91 = arith.subf %90, %88 : vector<32x1xf32>
    %c0_48 = arith.constant 0 : index
    %c1_49 = arith.constant 1 : index
    %92 = vector.load %arg9[%c0_48, %c1_49] : memref<32x2xf32, #tpu.memory_space<vmem>>, vector<32x1xf32>
    tpu.vector_store %arg9[%c0_48, %c1_49], %91 {strides = array<i32>} : memref<32x2xf32, #tpu.memory_space<vmem>>, vector<32x1xf32>,
    return
  }
}

</mosaic_0001>

<llo_original>
// kernel: predictor_forward.1
$region0: #{predictor_forward.1}
  #allocation0 [shape = 'u32[]', space=smem, size = 0x4, offset = 0x4, fixed_abs, tag = 'smem constant byte address 0x4 - core index']
  #allocation1 [shape = 'u32[72,128]{1,0:T(1,128)}', space=vmem, size = 0x9000, scoped, tag = 'internal scratch']
  %s0 = inlined_call_operand.vmem [shape: f32[32,128], index: 0, kind: input, shape index: {}]
  %s1 = inlined_call_operand.vmem [shape: bf16[2,32], index: 1, kind: input, shape index: {}]
  %s2 = inlined_call_operand.vmem [shape: bf16[32,2], index: 2, kind: input, shape index: {}]
  %s3 = inlined_call_operand.vmem [shape: f32[8,128], index: 3, kind: input, shape index: {}]
  %s4 = inlined_call_operand.vmem [shape: bf16[128,128], index: 4, kind: input, shape index: {}]
  %s5 = inlined_call_operand.vmem [shape: bf16[128,64], index: 5, kind: input, shape index: {}]
  %s6 = inlined_call_operand.vmem [shape: bf16[128,64], index: 6, kind: input, shape index: {}]
  %s7 = inlined_call_operand.vmem [shape: bf16[64,32], index: 7, kind: input, shape index: {}]
  %s8 = inlined_call_operand.vmem [shape: bf16[32,1], index: 8, kind: input, shape index: {}]
  %s9 = inlined_call_operand.vmem [shape: f32[32,2], index: 9, kind: output, shape index: {}]
  %s10 = sld [smem:[#allocation0]]
  $region46: #{predictor_forward.1} parent=0
    _
  %s12 = ssub.s32 1, %s10
  %s13 = scalar_select 0, %s12, %s10
  // Predicated region
  $region2: #{predictor_forward.1} parent=0 // pred_check
    _
  $region3: #{predictor_forward.1} parent=0 // pred_check_branch
    %15 = sbr.rel (0) target = $region5
  $region4: #{predictor_forward.1} parent=0 // pred_region
    _
  $region5: #{predictor_forward.1} parent=0 // pred_fallthru
    _
  // Predicated region
  $region6: #{predictor_forward.1} parent=0 // pred_check
    _
  $region7: #{predictor_forward.1} parent=0 // pred_check_branch
    %17 = sbr.rel (0) target = $region9
  $region8: #{predictor_forward.1} parent=0 // pred_region
    _
  $region9: #{predictor_forward.1} parent=0 // pred_fallthru
    _
  // Predicated region
  $region10: #{predictor_forward.1} parent=0 // pred_check
    _
  $region11: #{predictor_forward.1} parent=0 // pred_check_branch
    %19 = sbr.rel (0) target = $region13
  $region12: #{predictor_forward.1} parent=0 // pred_region
    _
  $region13: #{predictor_forward.1} parent=0 // pred_fallthru
    _
  // Predicated region
  $region14: #{predictor_forward.1} parent=0 // pred_check
    _
  $region15: #{predictor_forward.1} parent=0 // pred_check_branch
    %21 = sbr.rel (0) target = $region17
  $region16: #{predictor_forward.1} parent=0 // pred_region
    _
  $region17: #{predictor_forward.1} parent=0 // pred_fallthru
    _
  // Predicated region
  $region18: #{predictor_forward.1} parent=0 // pred_check
    _
  $region19: #{predictor_forward.1} parent=0 // pred_check_branch
    %23 = sbr.rel (0) target = $region21
  $region20: #{predictor_forward.1} parent=0 // pred_region
    _
  $region21: #{predictor_forward.1} parent=0 // pred_fallthru
    _
  // Predicated region
  $region22: #{predictor_forward.1} parent=0 // pred_check
    _
  $region23: #{predictor_forward.1} parent=0 // pred_check_branch
    %25 = sbr.rel (0) target = $region25
  $region24: #{predictor_forward.1} parent=0 // pred_region
    _
  $region25: #{predictor_forward.1} parent=0 // pred_fallthru
    _
  // Predicated region
  $region26: #{predictor_forward.1} parent=0 // pred_check
    _
  $region27: #{predictor_forward.1} parent=0 // pred_check_branch
    %27 = sbr.rel (0) target = $region29
  $region28: #{predictor_forward.1} parent=0 // pred_region
    _
  $region29: #{predictor_forward.1} parent=0 // pred_fallthru
    _
  // Predicated region
  $region30: #{predictor_forward.1} parent=0 // pred_check
    _
  $region31: #{predictor_forward.1} parent=0 // pred_check_branch
    %29 = sbr.rel (0) target = $region33
  $region32: #{predictor_forward.1} parent=0 // pred_region
    _
  $region33: #{predictor_forward.1} parent=0 // pred_fallthru
    _
  // Predicated region
  $region34: #{predictor_forward.1} parent=0 // pred_check
    _
  $region35: #{predictor_forward.1} parent=0 // pred_check_branch
    %31 = sbr.rel (0) target = $region37
  $region36: #{predictor_forward.1} parent=0 // pred_region
    _
  $region37: #{predictor_forward.1} parent=0 // pred_fallthru
    _
  %v33 = vld [vmem:[%s0] sm:$0xff]
  %v34 = vld [vmem:[%s0 + $0x8] sm:$0xff]
  %v35 = vld [vmem:[%s0 + $0x10] sm:$0xff]
  %v36 = vld [vmem:[%s0 + $0x18] sm:$0xff]
  %v37 = vld [vmem:[%s3] sm:$0x1]
  %v38 = vld [vmem:[%s3 + $0x1] sm:$0x1]
  %v39 = vld [vmem:[%s3 + $0x2] sm:$0x1]
  %v40 = vld [vmem:[%s3 + $0x3] sm:$0x1]
  %v41 = vld [vmem:[%s3 + $0x4] sm:$0x1]
  %v42 = vld [vmem:[%s3 + $0x5] sm:$0x1]
  %43 = vadd.xlane.f32.xlu0 %v33
  %v44 = vpop.xlane.xlu0 %43
  %45 = vadd.xlane.f32.xlu0 %v34
  %v46 = vpop.xlane.xlu0 %45
  %47 = vadd.xlane.f32.xlu0 %v35
  %v48 = vpop.xlane.xlu0 %47
  %49 = vadd.xlane.f32.xlu0 %v36
  %v50 = vpop.xlane.xlu0 %49
  %v51 = vrcp.pop 128.0
  %v52 = vmul.f32 128.0, %v51
  %v53 = vsub.f32 1.0, %v52
  %v54 = vmul.f32 %v51, %v53
  %v55 = vadd.f32 %v51, %v54
  %vm56 = vweird.f32 %v51
  %v57 = vsel %vm56, %v51, %v55
  %v58 = vmul.f32 %v44, %v57
  %v59 = vmul.f32 %v46, %v57
  %v60 = vmul.f32 %v48, %v57
  %v61 = vmul.f32 %v50, %v57
  %v62 = vsub.f32 %v33, %v58
  %v63 = vsub.f32 %v34, %v59
  %v64 = vsub.f32 %v35, %v60
  %v65 = vsub.f32 %v36, %v61
  %v66 = vmul.f32 %v62, %v62
  %v67 = vmul.f32 %v63, %v63
  %v68 = vmul.f32 %v64, %v64
  %v69 = vmul.f32 %v65, %v65
  %70 = vadd.xlane.f32.xlu0 %v66
  %v71 = vpop.xlane.xlu0 %70
  %72 = vadd.xlane.f32.xlu0 %v67
  %v73 = vpop.xlane.xlu0 %72
  %74 = vadd.xlane.f32.xlu0 %v68
  %v75 = vpop.xlane.xlu0 %74
  %76 = vadd.xlane.f32.xlu0 %v69
  %v77 = vpop.xlane.xlu0 %76
  %v78 = vmul.f32 %v71, %v57
  %v79 = vmul.f32 %v73, %v57
  %v80 = vmul.f32 %v75, %v57
  %v81 = vmul.f32 %v77, %v57
  %v82 = vadd.f32 %v78, 1e-05
  %v83 = vadd.f32 %v79, 1e-05
  %v84 = vadd.f32 %v80, 1e-05
  %v85 = vadd.f32 %v81, 1e-05
  %v86 = vrsqrt.pop %v82
  %v87 = vmul.f32 %v86, %v82
  %v88 = vmul.f32 %v87, %v86
  %v89 = vmul.f32 0.5, %v88
  %v90 = vsub.f32 1.5, %v89
  %v91 = vmul.f32 %v86, %v90
  %vm92 = vweird.f32 %v82
  %vm93 = vweird.f32 %v86
  %vm94 = vmor %vm92, %vm93
  %v95 = vsel %vm94, %v86, %v91
  %v96 = vrsqrt.pop %v83
  %v97 = vmul.f32 %v96, %v83
  %v98 = vmul.f32 %v97, %v96
  %v99 = vmul.f32 0.5, %v98
  %v100 = vsub.f32 1.5, %v99
  %v101 = vmul.f32 %v96, %v100
  %vm102 = vweird.f32 %v83
  %vm103 = vweird.f32 %v96
  %vm104 = vmor %vm102, %vm103
  %v105 = vsel %vm104, %v96, %v101
  %v106 = vrsqrt.pop %v84
  %v107 = vmul.f32 %v106, %v84
  %v108 = vmul.f32 %v107, %v106
  %v109 = vmul.f32 0.5, %v108
  %v110 = vsub.f32 1.5, %v109
  %v111 = vmul.f32 %v106, %v110
  %vm112 = vweird.f32 %v84
  %vm113 = vweird.f32 %v106
  %vm114 = vmor %vm112, %vm113
  %v115 = vsel %vm114, %v106, %v111
  %v116 = vrsqrt.pop %v85
  %v117 = vmul.f32 %v116, %v85
  %v118 = vmul.f32 %v117, %v116
  %v119 = vmul.f32 0.5, %v118
  %v120 = vsub.f32 1.5, %v119
  %v121 = vmul.f32 %v116, %v120
  %vm122 = vweird.f32 %v85
  %vm123 = vweird.f32 %v116
  %vm124 = vmor %vm122, %vm123
  %v125 = vsel %vm124, %v116, %v121
  %v126 = vmul.f32 %v62, %v95
  %v127 = vmul.f32 %v63, %v105
  %v128 = vmul.f32 %v64, %v115
  %v129 = vmul.f32 %v65, %v125
  %v130 = vperm.slane %v37, 0
  %v131 = vmul.f32 %v126, %v130
  %v132 = vmul.f32 %v127, %v130
  %v133 = vmul.f32 %v128, %v130
  %v134 = vmul.f32 %v129, %v130
  %v135 = vperm.slane %v38, 0
  %v136 = vadd.f32 %v131, %v135
  %v137 = vadd.f32 %v132, %v135
  %v138 = vadd.f32 %v133, %v135
  %v139 = vadd.f32 %v134, %v135
  %v140 = vpack.c.bf16 %v137, %v136
  %v141 = vpack.c.bf16 %v139, %v138
  %v142 = vld [vmem:[%s4] sm:$0xf]
  %v143 = vld [vmem:[%s4 + $0x4] sm:$0xf]
  %v144 = vld [vmem:[%s4 + $0x8] sm:$0xf]
  %v145 = vld [vmem:[%s4 + $0xc] sm:$0xf]
  %v146 = vld [vmem:[%s4 + $0x10] sm:$0xf]
  %v147 = vld [vmem:[%s4 + $0x14] sm:$0xf]
  %v148 = vld [vmem:[%s4 + $0x18] sm:$0xf]
  %v149 = vld [vmem:[%s4 + $0x1c] sm:$0xf]
  %v150 = vld [vmem:[%s4 + $0x20] sm:$0xf]
  %v151 = vld [vmem:[%s4 + $0x24] sm:$0xf]
  %v152 = vld [vmem:[%s4 + $0x28] sm:$0xf]
  %v153 = vld [vmem:[%s4 + $0x2c] sm:$0xf]
  %v154 = vld [vmem:[%s4 + $0x30] sm:$0xf]
  %v155 = vld [vmem:[%s4 + $0x34] sm:$0xf]
  %v156 = vld [vmem:[%s4 + $0x38] sm:$0xf]
  %v157 = vld [vmem:[%s4 + $0x3c] sm:$0xf]
  %v158 = vperm.slane %v39, 0
  %v175 = vunpack.c.l.b16 %v142
  %v176 = vunpack.c.l.b16 %v143
  %v177 = vunpack.c.l.b16 %v144
  %v178 = vunpack.c.l.b16 %v145
  %v179 = vunpack.c.l.b16 %v146
  %v180 = vunpack.c.l.b16 %v147
  %v181 = vunpack.c.l.b16 %v148
  %v182 = vunpack.c.l.b16 %v149
  %v183 = vunpack.c.l.b16 %v150
  %v184 = vunpack.c.l.b16 %v151
  %v185 = vunpack.c.l.b16 %v152
  %v186 = vunpack.c.l.b16 %v153
  %v187 = vunpack.c.l.b16 %v154
  %v188 = vunpack.c.l.b16 %v155
  %v189 = vunpack.c.l.b16 %v156
  %v190 = vunpack.c.l.b16 %v157
  %v191 = vpack.c.b16 %v176, %v175
  %v192 = vpack.c.b16 %v178, %v177
  %v193 = vpack.c.b16 %v180, %v179
  %v194 = vpack.c.b16 %v182, %v181
  %v195 = vpack.c.b16 %v184, %v183
  %v196 = vpack.c.b16 %v186, %v185
  %v197 = vpack.c.b16 %v188, %v187
  %v198 = vpack.c.b16 %v190, %v189
  %207 = vmatpush.bf16.msra.mxu0 %v198
  %208 = vmatpush.bf16.msra.mxu0 %v197
  %209 = vmatpush.bf16.msra.mxu0 %v196
  %210 = vmatpush.bf16.msra.mxu0 %v195
  %211 = vmatpush.bf16.msra.mxu0 %v194
  %212 = vmatpush.bf16.msra.mxu0 %v193
  %213 = vmatpush.bf16.msra.mxu0 %v192
  %214 = vmatpush.bf16.msra.mxu0 %v191
  %215 = vmatmul.bf16.gmra.mxu0 %v140
  %v216 = vpop.f32.mrf.mxu0
  %v217 = vadd.f32 %v158, %v216
  %v218 = vpop.f32.mrf.mxu0
  %v219 = vadd.f32 %v158, %v218
  %220 = vmatmul.bf16.gmra.mxu0 %v141
  %v221 = vpop.f32.mrf.mxu0
  %v222 = vadd.f32 %v158, %v221
  %v223 = vpop.f32.mrf.mxu0
  %v224 = vadd.f32 %v158, %v223
  %225 = vdwg.mxu0
  %v226 = vmul.f32 %v217, 0.5
  %v227 = vmul.f32 %v219, 0.5
  %v228 = vmul.f32 %v222, 0.5
  %v229 = vmul.f32 %v224, 0.5
  %v230 = vmul.f32 %v217, 0.70710677
  %v231 = vmul.f32 %v219, 0.70710677
  %v232 = vmul.f32 %v222, 0.70710677
  %v233 = vmul.f32 %v224, 0.70710677
  %v234 = vmul.f32 %v230, %v230
  %v235 = vmin.f32 16.0, %v234
  %v236 = vmul.f32 %v235, 2.1237322e-06
  %v237 = vadd.f32 %v236, 0.00028619796
  %v238 = vmul.f32 %v235, %v237
  %v239 = vadd.f32 %v238, 0.0036580483
  %v240 = vmul.f32 %v235, %v239
  %v241 = vadd.f32 %v240, 0.05243302
  %v242 = vmul.f32 %v235, %v241
  %v243 = vadd.f32 %v242, 0.18741608
  %v244 = vmul.f32 %v235, %v243
  %v245 = vadd.f32 %v244, 1.1283791
  %v246 = vmul.f32 %v230, %v245
  %v247 = vmul.f32 %v235, 3.8918573e-05
  %v248 = vadd.f32 %v247, 0.001143296
  %v249 = vmul.f32 %v235, %v248
  %v250 = vadd.f32 %v249, 0.014752088
  %v251 = vmul.f32 %v235, %v250
  %v252 = vadd.f32 %v251, 0.112945676
  %v253 = vmul.f32 %v235, %v252
  %v254 = vadd.f32 %v253, 0.4994258
  %v255 = vmul.f32 %v235, %v254
  %v256 = vadd.f32 %v255, 1.0
  %v257 = vrcp.pop %v256
  %v258 = vmul.f32 %v256, %v257
  %v259 = vsub.f32 1.0, %v258
  %v260 = vmul.f32 %v257, %v259
  %v261 = vadd.f32 %v257, %v260
  %vm262 = vweird.f32 %v256
  %vm263 = vweird.f32 %v257
  %vm264 = vmor %vm262, %vm263
  %v265 = vsel %vm264, %v257, %v261
  %v266 = vand.u32 2147483647, %v256
  %vm267 = vcmp.eq.f32.partialorder %v266, 8.507059e+37
  %v268 = vand.u32 %v256, 2147483648
  %v269 = vor.u32 1.1754944e-38, %v268
  %v270 = vsel %vm267, %v269, %v265
  %v271 = vmul.f32 %v246, %v270
  %v272 = vmin.f32 %v271, 1.0
  %v273 = vmax.f32 %v272, -1.0
  %v274 = vmul.f32 %v231, %v231
  %v275 = vmin.f32 16.0, %v274
  %v276 = vmul.f32 %v275, 2.1237322e-06
  %v277 = vadd.f32 %v276, 0.00028619796
  %v278 = vmul.f32 %v275, %v277
  %v279 = vadd.f32 %v278, 0.0036580483
  %v280 = vmul.f32 %v275, %v279
  %v281 = vadd.f32 %v280, 0.05243302
  %v282 = vmul.f32 %v275, %v281
  %v283 = vadd.f32 %v282, 0.18741608
  %v284 = vmul.f32 %v275, %v283
  %v285 = vadd.f32 %v284, 1.1283791
  %v286 = vmul.f32 %v231, %v285
  %v287 = vmul.f32 %v275, 3.8918573e-05
  %v288 = vadd.f32 %v287, 0.001143296
  %v289 = vmul.f32 %v275, %v288
  %v290 = vadd.f32 %v289, 0.014752088
  %v291 = vmul.f32 %v275, %v290
  %v292 = vadd.f32 %v291, 0.112945676
  %v293 = vmul.f32 %v275, %v292
  %v294 = vadd.f32 %v293, 0.4994258
  %v295 = vmul.f32 %v275, %v294
  %v296 = vadd.f32 %v295, 1.0
  %v297 = vrcp.pop %v296
  %v298 = vmul.f32 %v296, %v297
  %v299 = vsub.f32 1.0, %v298
  %v300 = vmul.f32 %v297, %v299
  %v301 = vadd.f32 %v297, %v300
  %vm302 = vweird.f32 %v296
  %vm303 = vweird.f32 %v297
  %vm304 = vmor %vm302, %vm303
  %v305 = vsel %vm304, %v297, %v301
  %v306 = vand.u32 2147483647, %v296
  %vm307 = vcmp.eq.f32.partialorder %v306, 8.507059e+37
  %v308 = vand.u32 %v296, 2147483648
  %v309 = vor.u32 1.1754944e-38, %v308
  %v310 = vsel %vm307, %v309, %v305
  %v311 = vmul.f32 %v286, %v310
  %v312 = vmin.f32 %v311, 1.0
  %v313 = vmax.f32 %v312, -1.0
  %v314 = vmul.f32 %v232, %v232
  %v315 = vmin.f32 16.0, %v314
  %v316 = vmul.f32 %v315, 2.1237322e-06
  %v317 = vadd.f32 %v316, 0.00028619796
  %v318 = vmul.f32 %v315, %v317
  %v319 = vadd.f32 %v318, 0.0036580483
  %v320 = vmul.f32 %v315, %v319
  %v321 = vadd.f32 %v320, 0.05243302
  %v322 = vmul.f32 %v315, %v321
  %v323 = vadd.f32 %v322, 0.18741608
  %v324 = vmul.f32 %v315, %v323
  %v325 = vadd.f32 %v324, 1.1283791
  %v326 = vmul.f32 %v232, %v325
  %v327 = vmul.f32 %v315, 3.8918573e-05
  %v328 = vadd.f32 %v327, 0.001143296
  %v329 = vmul.f32 %v315, %v328
  %v330 = vadd.f32 %v329, 0.014752088
  %v331 = vmul.f32 %v315, %v330
  %v332 = vadd.f32 %v331, 0.112945676
  %v333 = vmul.f32 %v315, %v332
  %v334 = vadd.f32 %v333, 0.4994258
  %v335 = vmul.f32 %v315, %v334
  %v336 = vadd.f32 %v335, 1.0
  %v337 = vrcp.pop %v336
  %v338 = vmul.f32 %v336, %v337
  %v339 = vsub.f32 1.0, %v338
  %v340 = vmul.f32 %v337, %v339
  %v341 = vadd.f32 %v337, %v340
  %vm342 = vweird.f32 %v336
  %vm343 = vweird.f32 %v337
  %vm344 = vmor %vm342, %vm343
  %v345 = vsel %vm344, %v337, %v341
  %v346 = vand.u32 2147483647, %v336
  %vm347 = vcmp.eq.f32.partialorder %v346, 8.507059e+37
  %v348 = vand.u32 %v336, 2147483648
  %v349 = vor.u32 1.1754944e-38, %v348
  %v350 = vsel %vm347, %v349, %v345
  %v351 = vmul.f32 %v326, %v350
  %v352 = vmin.f32 %v351, 1.0
  %v353 = vmax.f32 %v352, -1.0
  %v354 = vmul.f32 %v233, %v233
  %v355 = vmin.f32 16.0, %v354
  %v356 = vmul.f32 %v355, 2.1237322e-06
  %v357 = vadd.f32 %v356, 0.00028619796
  %v358 = vmul.f32 %v355, %v357
  %v359 = vadd.f32 %v358, 0.0036580483
  %v360 = vmul.f32 %v355, %v359
  %v361 = vadd.f32 %v360, 0.05243302
  %v362 = vmul.f32 %v355, %v361
  %v363 = vadd.f32 %v362, 0.18741608
  %v364 = vmul.f32 %v355, %v363
  %v365 = vadd.f32 %v364, 1.1283791
  %v366 = vmul.f32 %v233, %v365
  %v367 = vmul.f32 %v355, 3.8918573e-05
  %v368 = vadd.f32 %v367, 0.001143296
  %v369 = vmul.f32 %v355, %v368
  %v370 = vadd.f32 %v369, 0.014752088
  %v371 = vmul.f32 %v355, %v370
  %v372 = vadd.f32 %v371, 0.112945676
  %v373 = vmul.f32 %v355, %v372
  %v374 = vadd.f32 %v373, 0.4994258
  %v375 = vmul.f32 %v355, %v374
  %v376 = vadd.f32 %v375, 1.0
  %v377 = vrcp.pop %v376
  %v378 = vmul.f32 %v376, %v377
  %v379 = vsub.f32 1.0, %v378
  %v380 = vmul.f32 %v377, %v379
  %v381 = vadd.f32 %v377, %v380
  %vm382 = vweird.f32 %v376
  %vm383 = vweird.f32 %v377
  %vm384 = vmor %vm382, %vm383
  %v385 = vsel %vm384, %v377, %v381
  %v386 = vand.u32 2147483647, %v376
  %vm387 = vcmp.eq.f32.partialorder %v386, 8.507059e+37
  %v388 = vand.u32 %v376, 2147483648
  %v389 = vor.u32 1.1754944e-38, %v388
  %v390 = vsel %vm387, %v389, %v385
  %v391 = vmul.f32 %v366, %v390
  %v392 = vmin.f32 %v391, 1.0
  %v393 = vmax.f32 %v392, -1.0
  %v394 = vadd.f32 %v273, 1.0
  %v395 = vadd.f32 %v313, 1.0
  %v396 = vadd.f32 %v353, 1.0
  %v397 = vadd.f32 %v393, 1.0
  %v398 = vmul.f32 %v226, %v394
  %v399 = vmul.f32 %v227, %v395
  %v400 = vmul.f32 %v228, %v396
  %v401 = vmul.f32 %v229, %v397
  %v402 = vpack.c.bf16 %v399, %v398
  %v403 = vpack.c.bf16 %v401, %v400
  %v404 = vld [vmem:[%s5] sm:$0xf]
  %v405 = vld [vmem:[%s5 + $0x4] sm:$0xf]
  %v406 = vld [vmem:[%s5 + $0x8] sm:$0xf]
  %v407 = vld [vmem:[%s5 + $0xc] sm:$0xf]
  %v408 = vld [vmem:[%s5 + $0x10] sm:$0xf]
  %v409 = vld [vmem:[%s5 + $0x14] sm:$0xf]
  %v410 = vld [vmem:[%s5 + $0x18] sm:$0xf]
  %v411 = vld [vmem:[%s5 + $0x1c] sm:$0xf]
  %v412 = vld [vmem:[%s5 + $0x20] sm:$0xf]
  %v413 = vld [vmem:[%s5 + $0x24] sm:$0xf]
  %v414 = vld [vmem:[%s5 + $0x28] sm:$0xf]
  %v415 = vld [vmem:[%s5 + $0x2c] sm:$0xf]
  %v416 = vld [vmem:[%s5 + $0x30] sm:$0xf]
  %v417 = vld [vmem:[%s5 + $0x34] sm:$0xf]
  %v418 = vld [vmem:[%s5 + $0x38] sm:$0xf]
  %v419 = vld [vmem:[%s5 + $0x3c] sm:$0xf]
  %v420 = vld [vmem:[%s1] sm:$0x1]
  %vm421 = vcmask 261120
  %v423 = vsel %vm421, %v420, 0
  %425 = vmatpush.bf16.msra.mxu0 0
  %426 = vmatpush.bf16.msra.mxu0 0
  %427 = vmatpush.bf16.msra.mxu0 0
  %428 = vmatpush.bf16.msra.mxu0 0
  %429 = vmatpush.bf16.msra.mxu0 0
  %430 = vmatpush.bf16.msra.mxu0 0
  %431 = vmatpush.bf16.msra.mxu0 %v403
  %432 = vmatpush.bf16.msra.mxu0 %v402
  %433 = vmatmul.bf16.gmra.mxu0 %v423
  %v434 = vpop.f32.mrf.mxu0
  %v435 = vadd.f32 0.0, %v434
  %v436 = vpop.f32.mrf.mxu0
  %437 = vdwg.mxu0
  %v438 = vpack.c.bf16 %v435, %v435
  %v439 = vld [vmem:[%s6] sm:$0xf]
  %v440 = vld [vmem:[%s6 + $0x4] sm:$0xf]
  %v441 = vld [vmem:[%s6 + $0x8] sm:$0xf]
  %v442 = vld [vmem:[%s6 + $0xc] sm:$0xf]
  %v443 = vld [vmem:[%s6 + $0x10] sm:$0xf]
  %v444 = vld [vmem:[%s6 + $0x14] sm:$0xf]
  %v445 = vld [vmem:[%s6 + $0x18] sm:$0xf]
  %v446 = vld [vmem:[%s6 + $0x1c] sm:$0xf]
  %v447 = vld [vmem:[%s6 + $0x20] sm:$0xf]
  %v448 = vld [vmem:[%s6 + $0x24] sm:$0xf]
  %v449 = vld [vmem:[%s6 + $0x28] sm:$0xf]
  %v450 = vld [vmem:[%s6 + $0x2c] sm:$0xf]
  %v451 = vld [vmem:[%s6 + $0x30] sm:$0xf]
  %v452 = vld [vmem:[%s6 + $0x34] sm:$0xf]
  %v453 = vld [vmem:[%s6 + $0x38] sm:$0xf]
  %v454 = vld [vmem:[%s6 + $0x3c] sm:$0xf]
  %v471 = vunpack.c.l.b16 %v439
  %v472 = vunpack.c.l.b16 %v440
  %v473 = vunpack.c.l.b16 %v441
  %v474 = vunpack.c.l.b16 %v442
  %v475 = vunpack.c.l.b16 %v443
  %v476 = vunpack.c.l.b16 %v444
  %v477 = vunpack.c.l.b16 %v445
  %v478 = vunpack.c.l.b16 %v446
  %v479 = vunpack.c.l.b16 %v447
  %v480 = vunpack.c.l.b16 %v448
  %v481 = vunpack.c.l.b16 %v449
  %v482 = vunpack.c.l.b16 %v450
  %v483 = vunpack.c.l.b16 %v451
  %v484 = vunpack.c.l.b16 %v452
  %v485 = vunpack.c.l.b16 %v453
  %v486 = vunpack.c.l.b16 %v454
  %v487 = vpack.c.b16 %v472, %v471
  %v488 = vpack.c.b16 %v474, %v473
  %v489 = vpack.c.b16 %v476, %v475
  %v490 = vpack.c.b16 %v478, %v477
  %v491 = vpack.c.b16 %v480, %v479
  %v492 = vpack.c.b16 %v482, %v481
  %v493 = vpack.c.b16 %v484, %v483
  %v494 = vpack.c.b16 %v486, %v485
  %503 = vmatpush.bf16.msra.mxu0 %v494
  %504 = vmatpush.bf16.msra.mxu0 %v493
  %505 = vmatpush.bf16.msra.mxu0 %v492
  %506 = vmatpush.bf16.msra.mxu0 %v491
  %507 = vmatpush.bf16.msra.mxu0 %v490
  %508 = vmatpush.bf16.msra.mxu0 %v489
  %509 = vmatpush.bf16.msra.mxu0 %v488
  %510 = vmatpush.bf16.msra.mxu0 %v487
  %511 = vmatmul.bf16.gmra.mxu0 %v438
  %v512 = vpop.f32.mrf.mxu0
  %v513 = vadd.f32 0.0, %v512
  %v514 = vpop.f32.mrf.mxu0
  %515 = vdwg.mxu0
  %v516 = vld [vmem:[%s2] sm:$0xf]
  %v517 = vld [vmem:[%s2 + $0x4] sm:$0xf]
  %v518 = vld [vmem:[%s2 + $0x8] sm:$0xf]
  %v519 = vld [vmem:[%s2 + $0xc] sm:$0xf]
  %v520 = vpack.c.bf16 %v513, %v513
  %v525 = vunpack.c.l.b16 %v516
  %v526 = vunpack.c.l.b16 %v517
  %v527 = vunpack.c.l.b16 %v518
  %v528 = vunpack.c.l.b16 %v519
  %v529 = vpack.c.b16 %v526, %v525
  %v530 = vpack.c.b16 %v528, %v527
  %vm531 = vcmask 15360
  %v533 = vsel %vm531, %v529, 0
  %v536 = vsel %vm531, %v530, 0
  %vm538 = vcmask 1040384
  %v540 = vsel %vm538, %v520, 0
  %542 = vmatpush.bf16.msra.mxu0 0
  %543 = vmatpush.bf16.msra.mxu0 0
  %544 = vmatpush.bf16.msra.mxu0 0
  %545 = vmatpush.bf16.msra.mxu0 0
  %546 = vmatpush.bf16.msra.mxu0 0
  %547 = vmatpush.bf16.msra.mxu0 0
  %548 = vmatpush.bf16.msra.mxu0 0
  %549 = vmatpush.bf16.msra.mxu0 %v540
  %550 = vmatmul.bf16.gmra.mxu0 %v533
  %v551 = vpop.f32.mrf.mxu0
  %v552 = vadd.f32 0.0, %v551
  %v553 = vpop.f32.mrf.mxu0
  %v554 = vadd.f32 0.0, %v553
  %555 = vmatmul.bf16.gmra.mxu0 %v536
  %v556 = vpop.f32.mrf.mxu0
  %v557 = vadd.f32 0.0, %v556
  %v558 = vpop.f32.mrf.mxu0
  %v559 = vadd.f32 0.0, %v558
  %560 = vdwg.mxu0
  %v577 = vunpack.c.l.b16 %v404
  %v578 = vunpack.c.l.b16 %v405
  %v579 = vunpack.c.l.b16 %v406
  %v580 = vunpack.c.l.b16 %v407
  %v581 = vunpack.c.l.b16 %v408
  %v582 = vunpack.c.l.b16 %v409
  %v583 = vunpack.c.l.b16 %v410
  %v584 = vunpack.c.l.b16 %v411
  %v585 = vunpack.c.l.b16 %v412
  %v586 = vunpack.c.l.b16 %v413
  %v587 = vunpack.c.l.b16 %v414
  %v588 = vunpack.c.l.b16 %v415
  %v589 = vunpack.c.l.b16 %v416
  %v590 = vunpack.c.l.b16 %v417
  %v591 = vunpack.c.l.b16 %v418
  %v592 = vunpack.c.l.b16 %v419
  %v593 = vpack.c.b16 %v578, %v577
  %v594 = vpack.c.b16 %v580, %v579
  %v595 = vpack.c.b16 %v582, %v581
  %v596 = vpack.c.b16 %v584, %v583
  %v597 = vpack.c.b16 %v586, %v585
  %v598 = vpack.c.b16 %v588, %v587
  %v599 = vpack.c.b16 %v590, %v589
  %v600 = vpack.c.b16 %v592, %v591
  %609 = vmatpush.bf16.msra.mxu0 %v600
  %610 = vmatpush.bf16.msra.mxu0 %v599
  %611 = vmatpush.bf16.msra.mxu0 %v598
  %612 = vmatpush.bf16.msra.mxu0 %v597
  %613 = vmatpush.bf16.msra.mxu0 %v596
  %614 = vmatpush.bf16.msra.mxu0 %v595
  %615 = vmatpush.bf16.msra.mxu0 %v594
  %616 = vmatpush.bf16.msra.mxu0 %v593
  %617 = vmatmul.bf16.gmra.mxu0 %v402
  %v618 = vpop.f32.mrf.mxu0
  %v619 = vadd.f32 %v552, %v618
  %v620 = vpop.f32.mrf.mxu0
  %v621 = vadd.f32 %v554, %v620
  %622 = vmatmul.bf16.gmra.mxu0 %v403
  %v623 = vpop.f32.mrf.mxu0
  %v624 = vadd.f32 %v557, %v623
  %v625 = vpop.f32.mrf.mxu0
  %v626 = vadd.f32 %v559, %v625
  %627 = vdwg.mxu0
  %v628 = vperm.slane %v40, 0
  %v629 = vadd.f32 %v619, %v628
  %v630 = vadd.f32 %v621, %v628
  %v631 = vadd.f32 %v624, %v628
  %v632 = vadd.f32 %v626, %v628
  %v633 = vmul.f32 %v629, 0.5
  %v634 = vmul.f32 %v630, 0.5
  %v635 = vmul.f32 %v631, 0.5
  %v636 = vmul.f32 %v632, 0.5
  %v637 = vmul.f32 %v629, 0.70710677
  %v638 = vmul.f32 %v630, 0.70710677
  %v639 = vmul.f32 %v631, 0.70710677
  %v640 = vmul.f32 %v632, 0.70710677
  %v641 = vmul.f32 %v637, %v637
  %v642 = vmin.f32 16.0, %v641
  %v643 = vmul.f32 %v642, 2.1237322e-06
  %v644 = vadd.f32 %v643, 0.00028619796
  %v645 = vmul.f32 %v642, %v644
  %v646 = vadd.f32 %v645, 0.0036580483
  %v647 = vmul.f32 %v642, %v646
  %v648 = vadd.f32 %v647, 0.05243302
  %v649 = vmul.f32 %v642, %v648
  %v650 = vadd.f32 %v649, 0.18741608
  %v651 = vmul.f32 %v642, %v650
  %v652 = vadd.f32 %v651, 1.1283791
  %v653 = vmul.f32 %v637, %v652
  %v654 = vmul.f32 %v642, 3.8918573e-05
  %v655 = vadd.f32 %v654, 0.001143296
  %v656 = vmul.f32 %v642, %v655
  %v657 = vadd.f32 %v656, 0.014752088
  %v658 = vmul.f32 %v642, %v657
  %v659 = vadd.f32 %v658, 0.112945676
  %v660 = vmul.f32 %v642, %v659
  %v661 = vadd.f32 %v660, 0.4994258
  %v662 = vmul.f32 %v642, %v661
  %v663 = vadd.f32 %v662, 1.0
  %v664 = vrcp.pop %v663
  %v665 = vmul.f32 %v663, %v664
  %v666 = vsub.f32 1.0, %v665
  %v667 = vmul.f32 %v664, %v666
  %v668 = vadd.f32 %v664, %v667
  %vm669 = vweird.f32 %v663
  %vm670 = vweird.f32 %v664
  %vm671 = vmor %vm669, %vm670
  %v672 = vsel %vm671, %v664, %v668
  %v673 = vand.u32 2147483647, %v663
  %vm674 = vcmp.eq.f32.partialorder %v673, 8.507059e+37
  %v675 = vand.u32 %v663, 2147483648
  %v676 = vor.u32 1.1754944e-38, %v675
  %v677 = vsel %vm674, %v676, %v672
  %v678 = vmul.f32 %v653, %v677
  %v679 = vmin.f32 %v678, 1.0
  %v680 = vmax.f32 %v679, -1.0
  %v681 = vmul.f32 %v638, %v638
  %v682 = vmin.f32 16.0, %v681
  %v683 = vmul.f32 %v682, 2.1237322e-06
  %v684 = vadd.f32 %v683, 0.00028619796
  %v685 = vmul.f32 %v682, %v684
  %v686 = vadd.f32 %v685, 0.0036580483
  %v687 = vmul.f32 %v682, %v686
  %v688 = vadd.f32 %v687, 0.05243302
  %v689 = vmul.f32 %v682, %v688
  %v690 = vadd.f32 %v689, 0.18741608
  %v691 = vmul.f32 %v682, %v690
  %v692 = vadd.f32 %v691, 1.1283791
  %v693 = vmul.f32 %v638, %v692
  %v694 = vmul.f32 %v682, 3.8918573e-05
  %v695 = vadd.f32 %v694, 0.001143296
  %v696 = vmul.f32 %v682, %v695
  %v697 = vadd.f32 %v696, 0.014752088
  %v698 = vmul.f32 %v682, %v697
  %v699 = vadd.f32 %v698, 0.112945676
  %v700 = vmul.f32 %v682, %v699
  %v701 = vadd.f32 %v700, 0.4994258
  %v702 = vmul.f32 %v682, %v701
  %v703 = vadd.f32 %v702, 1.0
  %v704 = vrcp.pop %v703
  %v705 = vmul.f32 %v703, %v704
  %v706 = vsub.f32 1.0, %v705
  %v707 = vmul.f32 %v704, %v706
  %v708 = vadd.f32 %v704, %v707
  %vm709 = vweird.f32 %v703
  %vm710 = vweird.f32 %v704
  %vm711 = vmor %vm709, %vm710
  %v712 = vsel %vm711, %v704, %v708
  %v713 = vand.u32 2147483647, %v703
  %vm714 = vcmp.eq.f32.partialorder %v713, 8.507059e+37
  %v715 = vand.u32 %v703, 2147483648
  %v716 = vor.u32 1.1754944e-38, %v715
  %v717 = vsel %vm714, %v716, %v712
  %v718 = vmul.f32 %v693, %v717
  %v719 = vmin.f32 %v718, 1.0
  %v720 = vmax.f32 %v719, -1.0
  %v721 = vmul.f32 %v639, %v639
  %v722 = vmin.f32 16.0, %v721
  %v723 = vmul.f32 %v722, 2.1237322e-06
  %v724 = vadd.f32 %v723, 0.00028619796
  %v725 = vmul.f32 %v722, %v724
  %v726 = vadd.f32 %v725, 0.0036580483
  %v727 = vmul.f32 %v722, %v726
  %v728 = vadd.f32 %v727, 0.05243302
  %v729 = vmul.f32 %v722, %v728
  %v730 = vadd.f32 %v729, 0.18741608
  %v731 = vmul.f32 %v722, %v730
  %v732 = vadd.f32 %v731, 1.1283791
  %v733 = vmul.f32 %v639, %v732
  %v734 = vmul.f32 %v722, 3.8918573e-05
  %v735 = vadd.f32 %v734, 0.001143296
  %v736 = vmul.f32 %v722, %v735
  %v737 = vadd.f32 %v736, 0.014752088
  %v738 = vmul.f32 %v722, %v737
  %v739 = vadd.f32 %v738, 0.112945676
  %v740 = vmul.f32 %v722, %v739
  %v741 = vadd.f32 %v740, 0.4994258
  %v742 = vmul.f32 %v722, %v741
  %v743 = vadd.f32 %v742, 1.0
  %v744 = vrcp.pop %v743
  %v745 = vmul.f32 %v743, %v744
  %v746 = vsub.f32 1.0, %v745
  %v747 = vmul.f32 %v744, %v746
  %v748 = vadd.f32 %v744, %v747
  %vm749 = vweird.f32 %v743
  %vm750 = vweird.f32 %v744
  %vm751 = vmor %vm749, %vm750
  %v752 = vsel %vm751, %v744, %v748
  %v753 = vand.u32 2147483647, %v743
  %vm754 = vcmp.eq.f32.partialorder %v753, 8.507059e+37
  %v755 = vand.u32 %v743, 2147483648
  %v756 = vor.u32 1.1754944e-38, %v755
  %v757 = vsel %vm754, %v756, %v752
  %v758 = vmul.f32 %v733, %v757
  %v759 = vmin.f32 %v758, 1.0
  %v760 = vmax.f32 %v759, -1.0
  %v761 = vmul.f32 %v640, %v640
  %v762 = vmin.f32 16.0, %v761
  %v763 = vmul.f32 %v762, 2.1237322e-06
  %v764 = vadd.f32 %v763, 0.00028619796
  %v765 = vmul.f32 %v762, %v764
  %v766 = vadd.f32 %v765, 0.0036580483
  %v767 = vmul.f32 %v762, %v766
  %v768 = vadd.f32 %v767, 0.05243302
  %v769 = vmul.f32 %v762, %v768
  %v770 = vadd.f32 %v769, 0.18741608
  %v771 = vmul.f32 %v762, %v770
  %v772 = vadd.f32 %v771, 1.1283791
  %v773 = vmul.f32 %v640, %v772
  %v774 = vmul.f32 %v762, 3.8918573e-05
  %v775 = vadd.f32 %v774, 0.001143296
  %v776 = vmul.f32 %v762, %v775
  %v777 = vadd.f32 %v776, 0.014752088
  %v778 = vmul.f32 %v762, %v777
  %v779 = vadd.f32 %v778, 0.112945676
  %v780 = vmul.f32 %v762, %v779
  %v781 = vadd.f32 %v780, 0.4994258
  %v782 = vmul.f32 %v762, %v781
  %v783 = vadd.f32 %v782, 1.0
  %v784 = vrcp.pop %v783
  %v785 = vmul.f32 %v783, %v784
  %v786 = vsub.f32 1.0, %v785
  %v787 = vmul.f32 %v784, %v786
  %v788 = vadd.f32 %v784, %v787
  %vm789 = vweird.f32 %v783
  %vm790 = vweird.f32 %v784
  %vm791 = vmor %vm789, %vm790
  %v792 = vsel %vm791, %v784, %v788
  %v793 = vand.u32 2147483647, %v783
  %vm794 = vcmp.eq.f32.partialorder %v793, 8.507059e+37
  %v795 = vand.u32 %v783, 2147483648
  %v796 = vor.u32 1.1754944e-38, %v795
  %v797 = vsel %vm794, %v796, %v792
  %v798 = vmul.f32 %v773, %v797
  %v799 = vmin.f32 %v798, 1.0
  %v800 = vmax.f32 %v799, -1.0
  %v801 = vadd.f32 %v680, 1.0
  %v802 = vadd.f32 %v720, 1.0
  %v803 = vadd.f32 %v760, 1.0
  %v804 = vadd.f32 %v800, 1.0
  %v805 = vmul.f32 %v633, %v801
  %v806 = vmul.f32 %v634, %v802
  %v807 = vmul.f32 %v635, %v803
  %v808 = vmul.f32 %v636, %v804
  %v809 = vpack.c.bf16 %v806, %v805
  %v810 = vpack.c.bf16 %v808, %v807
  %v811 = vld [vmem:[%s7] sm:$0xf]
  %v812 = vld [vmem:[%s7 + $0x4] sm:$0xf]
  %v813 = vld [vmem:[%s7 + $0x8] sm:$0xf]
  %v814 = vld [vmem:[%s7 + $0xc] sm:$0xf]
  %v815 = vld [vmem:[%s7 + $0x10] sm:$0xf]
  %v816 = vld [vmem:[%s7 + $0x14] sm:$0xf]
  %v817 = vld [vmem:[%s7 + $0x18] sm:$0xf]
  %v818 = vld [vmem:[%s7 + $0x1c] sm:$0xf]
  %v819 = vperm.slane %v41, 0
  %v828 = vunpack.c.l.b16 %v811
  %v829 = vunpack.c.l.b16 %v812
  %v830 = vunpack.c.l.b16 %v813
  %v831 = vunpack.c.l.b16 %v814
  %v832 = vunpack.c.l.b16 %v815
  %v833 = vunpack.c.l.b16 %v816
  %v834 = vunpack.c.l.b16 %v817
  %v835 = vunpack.c.l.b16 %v818
  %v836 = vpack.c.b16 %v829, %v828
  %v837 = vpack.c.b16 %v831, %v830
  %v838 = vpack.c.b16 %v833, %v832
  %v839 = vpack.c.b16 %v835, %v834
  %vm844 = vcmask 523264
  %v846 = vsel %vm844, %v809, 0
  %v849 = vsel %vm844, %v810, 0
  %851 = vmatpush.bf16.msra.mxu0 0
  %852 = vmatpush.bf16.msra.mxu0 0
  %853 = vmatpush.bf16.msra.mxu0 0
  %854 = vmatpush.bf16.msra.mxu0 0
  %855 = vmatpush.bf16.msra.mxu0 %v839
  %856 = vmatpush.bf16.msra.mxu0 %v838
  %857 = vmatpush.bf16.msra.mxu0 %v837
  %858 = vmatpush.bf16.msra.mxu0 %v836
  %859 = vmatmul.bf16.gmra.mxu0 %v846
  %v860 = vpop.f32.mrf.mxu0
  %v861 = vadd.f32 %v819, %v860
  %v862 = vpop.f32.mrf.mxu0
  %v863 = vadd.f32 %v819, %v862
  %864 = vmatmul.bf16.gmra.mxu0 %v849
  %v865 = vpop.f32.mrf.mxu0
  %v866 = vadd.f32 %v819, %v865
  %v867 = vpop.f32.mrf.mxu0
  %v868 = vadd.f32 %v819, %v867
  %869 = vdwg.mxu0
  %v870 = vmul.f32 %v861, 0.5
  %v871 = vmul.f32 %v863, 0.5
  %v872 = vmul.f32 %v866, 0.5
  %v873 = vmul.f32 %v868, 0.5
  %v874 = vmul.f32 %v861, 0.70710677
  %v875 = vmul.f32 %v863, 0.70710677
  %v876 = vmul.f32 %v866, 0.70710677
  %v877 = vmul.f32 %v868, 0.70710677
  %v878 = vmul.f32 %v874, %v874
  %v879 = vmin.f32 16.0, %v878
  %v880 = vmul.f32 %v879, 2.1237322e-06
  %v881 = vadd.f32 %v880, 0.00028619796
  %v882 = vmul.f32 %v879, %v881
  %v883 = vadd.f32 %v882, 0.0036580483
  %v884 = vmul.f32 %v879, %v883
  %v885 = vadd.f32 %v884, 0.05243302
  %v886 = vmul.f32 %v879, %v885
  %v887 = vadd.f32 %v886, 0.18741608
  %v888 = vmul.f32 %v879, %v887
  %v889 = vadd.f32 %v888, 1.1283791
  %v890 = vmul.f32 %v874, %v889
  %v891 = vmul.f32 %v879, 3.8918573e-05
  %v892 = vadd.f32 %v891, 0.001143296
  %v893 = vmul.f32 %v879, %v892
  %v894 = vadd.f32 %v893, 0.014752088
  %v895 = vmul.f32 %v879, %v894
  %v896 = vadd.f32 %v895, 0.112945676
  %v897 = vmul.f32 %v879, %v896
  %v898 = vadd.f32 %v897, 0.4994258
  %v899 = vmul.f32 %v879, %v898
  %v900 = vadd.f32 %v899, 1.0
  %v901 = vrcp.pop %v900
  %v902 = vmul.f32 %v900, %v901
  %v903 = vsub.f32 1.0, %v902
  %v904 = vmul.f32 %v901, %v903
  %v905 = vadd.f32 %v901, %v904
  %vm906 = vweird.f32 %v900
  %vm907 = vweird.f32 %v901
  %vm908 = vmor %vm906, %vm907
  %v909 = vsel %vm908, %v901, %v905
  %v910 = vand.u32 2147483647, %v900
  %vm911 = vcmp.eq.f32.partialorder %v910, 8.507059e+37
  %v912 = vand.u32 %v900, 2147483648
  %v913 = vor.u32 1.1754944e-38, %v912
  %v914 = vsel %vm911, %v913, %v909
  %v915 = vmul.f32 %v890, %v914
  %v916 = vmin.f32 %v915, 1.0
  %v917 = vmax.f32 %v916, -1.0
  %v918 = vmul.f32 %v875, %v875
  %v919 = vmin.f32 16.0, %v918
  %v920 = vmul.f32 %v919, 2.1237322e-06
  %v921 = vadd.f32 %v920, 0.00028619796
  %v922 = vmul.f32 %v919, %v921
  %v923 = vadd.f32 %v922, 0.0036580483
  %v924 = vmul.f32 %v919, %v923
  %v925 = vadd.f32 %v924, 0.05243302
  %v926 = vmul.f32 %v919, %v925
  %v927 = vadd.f32 %v926, 0.18741608
  %v928 = vmul.f32 %v919, %v927
  %v929 = vadd.f32 %v928, 1.1283791
  %v930 = vmul.f32 %v875, %v929
  %v931 = vmul.f32 %v919, 3.8918573e-05
  %v932 = vadd.f32 %v931, 0.001143296
  %v933 = vmul.f32 %v919, %v932
  %v934 = vadd.f32 %v933, 0.014752088
  %v935 = vmul.f32 %v919, %v934
  %v936 = vadd.f32 %v935, 0.112945676
  %v937 = vmul.f32 %v919, %v936
  %v938 = vadd.f32 %v937, 0.4994258
  %v939 = vmul.f32 %v919, %v938
  %v940 = vadd.f32 %v939, 1.0
  %v941 = vrcp.pop %v940
  %v942 = vmul.f32 %v940, %v941
  %v943 = vsub.f32 1.0, %v942
  %v944 = vmul.f32 %v941, %v943
  %v945 = vadd.f32 %v941, %v944
  %vm946 = vweird.f32 %v940
  %vm947 = vweird.f32 %v941
  %vm948 = vmor %vm946, %vm947
  %v949 = vsel %vm948, %v941, %v945
  %v950 = vand.u32 2147483647, %v940
  %vm951 = vcmp.eq.f32.partialorder %v950, 8.507059e+37
  %v952 = vand.u32 %v940, 2147483648
  %v953 = vor.u32 1.1754944e-38, %v952
  %v954 = vsel %vm951, %v953, %v949
  %v955 = vmul.f32 %v930, %v954
  %v956 = vmin.f32 %v955, 1.0
  %v957 = vmax.f32 %v956, -1.0
  %v958 = vmul.f32 %v876, %v876
  %v959 = vmin.f32 16.0, %v958
  %v960 = vmul.f32 %v959, 2.1237322e-06
  %v961 = vadd.f32 %v960, 0.00028619796
  %v962 = vmul.f32 %v959, %v961
  %v963 = vadd.f32 %v962, 0.0036580483
  %v964 = vmul.f32 %v959, %v963
  %v965 = vadd.f32 %v964, 0.05243302
  %v966 = vmul.f32 %v959, %v965
  %v967 = vadd.f32 %v966, 0.18741608
  %v968 = vmul.f32 %v959, %v967
  %v969 = vadd.f32 %v968, 1.1283791
  %v970 = vmul.f32 %v876, %v969
  %v971 = vmul.f32 %v959, 3.8918573e-05
  %v972 = vadd.f32 %v971, 0.001143296
  %v973 = vmul.f32 %v959, %v972
  %v974 = vadd.f32 %v973, 0.014752088
  %v975 = vmul.f32 %v959, %v974
  %v976 = vadd.f32 %v975, 0.112945676
  %v977 = vmul.f32 %v959, %v976
  %v978 = vadd.f32 %v977, 0.4994258
  %v979 = vmul.f32 %v959, %v978
  %v980 = vadd.f32 %v979, 1.0
  %v981 = vrcp.pop %v980
  %v982 = vmul.f32 %v980, %v981
  %v983 = vsub.f32 1.0, %v982
  %v984 = vmul.f32 %v981, %v983
  %v985 = vadd.f32 %v981, %v984
  %vm986 = vweird.f32 %v980
  %vm987 = vweird.f32 %v981
  %vm988 = vmor %vm986, %vm987
  %v989 = vsel %vm988, %v981, %v985
  %v990 = vand.u32 2147483647, %v980
  %vm991 = vcmp.eq.f32.partialorder %v990, 8.507059e+37
  %v992 = vand.u32 %v980, 2147483648
  %v993 = vor.u32 1.1754944e-38, %v992
  %v994 = vsel %vm991, %v993, %v989
  %v995 = vmul.f32 %v970, %v994
  %v996 = vmin.f32 %v995, 1.0
  %v997 = vmax.f32 %v996, -1.0
  %v998 = vmul.f32 %v877, %v877
  %v999 = vmin.f32 16.0, %v998
  %v1000 = vmul.f32 %v999, 2.1237322e-06
  %v1001 = vadd.f32 %v1000, 0.00028619796
  %v1002 = vmul.f32 %v999, %v1001
  %v1003 = vadd.f32 %v1002, 0.0036580483
  %v1004 = vmul.f32 %v999, %v1003
  %v1005 = vadd.f32 %v1004, 0.05243302
  %v1006 = vmul.f32 %v999, %v1005
  %v1007 = vadd.f32 %v1006, 0.18741608
  %v1008 = vmul.f32 %v999, %v1007
  %v1009 = vadd.f32 %v1008, 1.1283791
  %v1010 = vmul.f32 %v877, %v1009
  %v1011 = vmul.f32 %v999, 3.8918573e-05
  %v1012 = vadd.f32 %v1011, 0.001143296
  %v1013 = vmul.f32 %v999, %v1012
  %v1014 = vadd.f32 %v1013, 0.014752088
  %v1015 = vmul.f32 %v999, %v1014
  %v1016 = vadd.f32 %v1015, 0.112945676
  %v1017 = vmul.f32 %v999, %v1016
  %v1018 = vadd.f32 %v1017, 0.4994258
  %v1019 = vmul.f32 %v999, %v1018
  %v1020 = vadd.f32 %v1019, 1.0
  %v1021 = vrcp.pop %v1020
  %v1022 = vmul.f32 %v1020, %v1021
  %v1023 = vsub.f32 1.0, %v1022
  %v1024 = vmul.f32 %v1021, %v1023
  %v1025 = vadd.f32 %v1021, %v1024
  %vm1026 = vweird.f32 %v1020
  %vm1027 = vweird.f32 %v1021
  %vm1028 = vmor %vm1026, %vm1027
  %v1029 = vsel %vm1028, %v1021, %v1025
  %v1030 = vand.u32 2147483647, %v1020
  %vm1031 = vcmp.eq.f32.partialorder %v1030, 8.507059e+37
  %v1032 = vand.u32 %v1020, 2147483648
  %v1033 = vor.u32 1.1754944e-38, %v1032
  %v1034 = vsel %vm1031, %v1033, %v1029
  %v1035 = vmul.f32 %v1010, %v1034
  %v1036 = vmin.f32 %v1035, 1.0
  %v1037 = vmax.f32 %v1036, -1.0
  %v1038 = vadd.f32 %v917, 1.0
  %v1039 = vadd.f32 %v957, 1.0
  %v1040 = vadd.f32 %v997, 1.0
  %v1041 = vadd.f32 %v1037, 1.0
  %v1042 = vmul.f32 %v870, %v1038
  %v1043 = vmul.f32 %v871, %v1039
  %v1044 = vmul.f32 %v872, %v1040
  %v1045 = vmul.f32 %v873, %v1041
  %v1046 = vpack.c.bf16 %v1043, %v1042
  %v1047 = vpack.c.bf16 %v1045, %v1044
  %v1048 = vld [vmem:[%s8] sm:$0xf]
  %v1049 = vld [vmem:[%s8 + $0x4] sm:$0xf]
  %v1050 = vld [vmem:[%s8 + $0x8] sm:$0xf]
  %v1051 = vld [vmem:[%s8 + $0xc] sm:$0xf]
  %v1052 = vperm.slane %v42, 0
  %v1057 = vunpack.c.l.b16 %v1048
  %v1058 = vunpack.c.l.b16 %v1049
  %v1059 = vunpack.c.l.b16 %v1050
  %v1060 = vunpack.c.l.b16 %v1051
  %v1061 = vpack.c.b16 %v1058, %v1057
  %v1062 = vpack.c.b16 %v1060, %v1059
  %v1066 = vsel %vm421, %v1046, 0
  %v1069 = vsel %vm421, %v1047, 0
  %1071 = vmatpush.bf16.msra.mxu0 0
  %1072 = vmatpush.bf16.msra.mxu0 0
  %1073 = vmatpush.bf16.msra.mxu0 0
  %1074 = vmatpush.bf16.msra.mxu0 0
  %1075 = vmatpush.bf16.msra.mxu0 0
  %1076 = vmatpush.bf16.msra.mxu0 0
  %1077 = vmatpush.bf16.msra.mxu0 %v1062
  %1078 = vmatpush.bf16.msra.mxu0 %v1061
  %1079 = vmatmul.bf16.gmra.mxu0 %v1066
  %v1080 = vpop.f32.mrf.mxu0
  %v1081 = vadd.f32 %v1052, %v1080
  %v1082 = vpop.f32.mrf.mxu0
  %v1083 = vadd.f32 %v1052, %v1082
  %1084 = vmatmul.bf16.gmra.mxu0 %v1069
  %v1085 = vpop.f32.mrf.mxu0
  %v1086 = vadd.f32 %v1052, %v1085
  %v1087 = vpop.f32.mrf.mxu0
  %v1088 = vadd.f32 %v1052, %v1087
  %1089 = vdwg.mxu0
  %v1090 = vmul.f32 %v1081, 0.5
  %v1091 = vmul.f32 %v1083, 0.5
  %v1092 = vmul.f32 %v1086, 0.5
  %v1093 = vmul.f32 %v1088, 0.5
  %v1094 = vtanh.pop %v1090
  %v1095 = vtanh.pop %v1091
  %v1096 = vtanh.pop %v1092
  %v1097 = vtanh.pop %v1093
  %v1098 = vadd.f32 %v1094, 1.0
  %v1099 = vadd.f32 %v1095, 1.0
  %v1100 = vadd.f32 %v1096, 1.0
  %v1101 = vadd.f32 %v1097, 1.0
  %v1102 = vmul.f32 %v1098, 0.5
  %v1103 = vmul.f32 %v1099, 0.5
  %v1104 = vmul.f32 %v1100, 0.5
  %v1105 = vmul.f32 %v1101, 0.5
  %vm1106 = vcmask 7168
  %1107 = vst.msk [vmem:[%s9] sm:$0xff] %vm1106, %v1102
  %1108 = vst.msk [vmem:[%s9 + $0x8] sm:$0xff] %vm1106, %v1103
  %1109 = vst.msk [vmem:[%s9 + $0x10] sm:$0xff] %vm1106, %v1104
  %1110 = vst.msk [vmem:[%s9 + $0x18] sm:$0xff] %vm1106, %v1105
  %v1111 = vsub.f32 1.0, %v1102
  %v1112 = vsub.f32 1.0, %v1103
  %v1113 = vsub.f32 1.0, %v1104
  %v1114 = vsub.f32 1.0, %v1105
  %1119 = vrot.lane.b32.xlu0 %v1111, 1
  %v1120 = vpop.permute.xlu0 %1119
  %1121 = vrot.lane.b32.xlu0 %v1112, 1
  %v1122 = vpop.permute.xlu0 %1121
  %1123 = vrot.lane.b32.xlu0 %v1113, 1
  %v1124 = vpop.permute.xlu0 %1123
  %1125 = vrot.lane.b32.xlu0 %v1114, 1
  %v1126 = vpop.permute.xlu0 %1125
  %vm1131 = vcmask 15368
  %1132 = vst.msk [vmem:[%s9] sm:$0xff] %vm1131, %v1120
  %1133 = vst.msk [vmem:[%s9 + $0x8] sm:$0xff] %vm1131, %v1122
  %1134 = vst.msk [vmem:[%s9 + $0x10] sm:$0xff] %vm1131, %v1124
  %1135 = vst.msk [vmem:[%s9 + $0x18] sm:$0xff] %vm1131, %v1126
  // Predicated region
  $region38: #{predictor_forward.1} parent=0 // pred_check
    _
  $region39: #{predictor_forward.1} parent=0 // pred_check_branch
    %1137 = sbr.rel (0) target = $region41
  $region40: #{predictor_forward.1} parent=0 // pred_region
    _
  $region41: #{predictor_forward.1} parent=0 // pred_fallthru
    _
  // Predicated region
  $region42: #{predictor_forward.1} parent=0 // pred_check
    _
  $region43: #{predictor_forward.1} parent=0 // pred_check_branch
    %1139 = sbr.rel (0) target = $region45
  $region44: #{predictor_forward.1} parent=0 // pred_region
    _
  $region45: #{predictor_forward.1} parent=0 // pred_fallthru
    _

</llo_original>
